<compile_context>
chip_gen: v5e
topology: v5e:2x2
jax: 0.10.0
libtpu: 0.0.40
codegen_flags: <defaults>
</compile_context>

<pallas_src>
import functools

import jax
import jax.numpy as jnp
from jax.experimental import pallas as pl
from jax.experimental.pallas import tpu as pltpu

LANE = 128


# --------------------------------------------------------------------------- kernels
def _mlp_layer(h_prev, w, b, gamma, beta, *, inv_b, eps, mm_dtype):
    """One hidden layer: Linear + residual add + ReLU + training-mode BatchNorm1d."""
    h = jnp.dot(h_prev.astype(mm_dtype), w, preferred_element_type=jnp.float32) + b
    h = jnp.maximum(h + h_prev, 0.0)
    # Centered two-pass batch statistics (cheap VPU work, avoids E[x^2]-E[x]^2 cancellation).
    mean = jnp.sum(h, axis=0, keepdims=True) * inv_b
    d = h - mean
    var = jnp.sum(d * d, axis=0, keepdims=True) * inv_b
    scale = gamma * jax.lax.rsqrt(var + eps)
    return d * scale + beta


def _resident_kernel(x_ref, w_in_ref, b_in_ref, w_h_ref, b_h_ref,
                     gamma_ref, beta_ref, w_out_ref, b_out_ref,
                     o_ref, act_ref, *, eps):
    """All weights resident in VMEM; layers walked by an in-kernel fori_loop."""
    mm_dtype = w_h_ref.dtype
    inv_b = 1.0 / act_ref.shape[0]          # real batch size (batch is never padded)
    num_layers = w_h_ref.shape[0]

    r = jnp.dot(x_ref[...].astype(mm_dtype), w_in_ref[...],
                preferred_element_type=jnp.float32) + b_in_ref[...]
    act_ref[...] = jnp.maximum(r, 0.0)

    gamma = gamma_ref[...]
    beta = beta_ref[...]

    def body(l, carry):
        act_ref[...] = _mlp_layer(act_ref[...], w_h_ref[l], b_h_ref[l],
                                  gamma, beta, inv_b=inv_b, eps=eps, mm_dtype=mm_dtype)
        return carry

    jax.lax.fori_loop(0, num_layers, body, 0)

    out = jnp.dot(act_ref[...].astype(mm_dtype), w_out_ref[...],
                  preferred_element_type=jnp.float32) + b_out_ref[...]
    o_ref[...] = out.astype(o_ref.dtype)


def _streamed_kernel(x_ref, w_in_ref, b_in_ref, w_h_ref, b_h_ref,
                     gamma_ref, beta_ref, w_out_ref, b_out_ref,
                     o_ref, act_ref, *, eps):
    """One hidden layer per grid step; w_h streamed, b_h resident and indexed with l."""
    l = pl.program_id(0)
    last = pl.num_programs(0) - 1
    mm_dtype = w_h_ref.dtype
    inv_b = 1.0 / act_ref.shape[0]

    @pl.when(l == 0)
    def _():
        r = jnp.dot(x_ref[...].astype(mm_dtype), w_in_ref[...],
                    preferred_element_type=jnp.float32) + b_in_ref[...]
        act_ref[...] = jnp.maximum(r, 0.0)

    normed = _mlp_layer(act_ref[...], w_h_ref[...], b_h_ref[l],
                        gamma_ref[...], beta_ref[...],
                        inv_b=inv_b, eps=eps, mm_dtype=mm_dtype)
    act_ref[...] = normed

    @pl.when(l == last)
    def _():
        out = jnp.dot(normed.astype(mm_dtype), w_out_ref[...],
                      preferred_element_type=jnp.float32) + b_out_ref[...]
        o_ref[...] = out.astype(o_ref.dtype)


# --------------------------------------------------------------------------- helpers
def _round_up(n, m):
    return ((n + m - 1) // m) * m


def _vmem_cap_bytes():
    """~85% of this generation's physical VMEM (conservative v7x fallback if unknown)."""
    try:
        cap = int(pltpu.get_tpu_info().vmem_capacity_bytes)
    except Exception:
        cap = 64 << 20                       # assume smallest-VMEM generation (v7x)
    return int(cap * 0.85)


def _bspec(block_shape, index_map, buffers=None):
    """BlockSpec with an optional buffer-count hint.

    Buffered(1) keeps grid-invariant inputs single-buffered (resident, fetched once);
    Buffered(3) deepens the streamed-weight pipeline.  Falls back to the default
    double-buffering if this JAX build does not expose BlockSpec(pipeline_mode=...).
    """
    if buffers is not None:
        try:
            return pl.BlockSpec(block_shape, index_map, pipeline_mode=pl.Buffered(buffers))
        except (TypeError, AttributeError):
            pass
    return pl.BlockSpec(block_shape, index_map)


def _pad_operands(x, params, num_layers, matmul_dtype):
    """Zero-pad feature dims to lane-dense widths.

    Padded weight rows/cols, biases, gamma/beta are zero, so padded feature columns stay
    exactly 0 through every layer (input proj, residual+ReLU, BN: mean=var=0 ->
    0*scale+beta_pad(0)=0) and never perturb real outputs.
    """
    B, in_size = x.shape
    hidden = params["w_in"].shape[1]
    out_size = params["w_out"].shape[1]
    Ip, Hp, Op = (_round_up(n, LANE) for n in (in_size, hidden, out_size))
    f32 = jnp.float32

    xp    = jnp.zeros((B, Ip), f32).at[:, :in_size].set(x.astype(f32))
    w_in  = jnp.zeros((Ip, Hp), f32).at[:in_size, :hidden].set(params["w_in"]).astype(matmul_dtype)
    b_in  = jnp.zeros((1, Hp), f32).at[:, :hidden].set(params["b_in"])
    w_h   = jnp.zeros((num_layers, Hp, Hp), f32).at[:, :hidden, :hidden].set(params["w_h"]).astype(matmul_dtype)
    b_h   = jnp.zeros((num_layers, 1, Hp), f32).at[:, :, :hidden].set(params["b_h"])
    gamma = jnp.zeros((1, Hp), f32).at[:, :hidden].set(params["gamma"])
    beta  = jnp.zeros((1, Hp), f32).at[:, :hidden].set(params["beta"])
    w_out = jnp.zeros((Hp, Op), f32).at[:hidden, :out_size].set(params["w_out"]).astype(matmul_dtype)
    b_out = jnp.zeros((1, Op), f32).at[:, :out_size].set(params["b_out"])
    return (xp, w_in, b_in, w_h, b_h, gamma, beta, w_out, b_out), (Ip, Hp, Op)


def _call_resident(ops, *, B, Ip, Hp, Op, num_layers, eps, vmem_limit):
    grid_spec = pltpu.PrefetchScalarGridSpec(
        num_scalar_prefetch=0,
        grid=(1,),
        in_specs=[
            pl.BlockSpec((B, Ip), lambda i: (0, 0)),                    # x
            pl.BlockSpec((Ip, Hp), lambda i: (0, 0)),                   # w_in
            pl.BlockSpec((1, Hp), lambda i: (0, 0)),                    # b_in
            pl.BlockSpec((num_layers, Hp, Hp), lambda i: (0, 0, 0)),    # full w_h stack
            pl.BlockSpec((num_layers, 1, Hp), lambda i: (0, 0, 0)),     # full b_h stack
            pl.BlockSpec((1, Hp), lambda i: (0, 0)),                    # gamma
            pl.BlockSpec((1, Hp), lambda i: (0, 0)),                    # beta
            pl.BlockSpec((Hp, Op), lambda i: (0, 0)),                   # w_out
            pl.BlockSpec((1, Op), lambda i: (0, 0)),                    # b_out
        ],
        out_specs=pl.BlockSpec((B, Op), lambda i: (0, 0)),
        scratch_shapes=[pltpu.VMEM((B, Hp), jnp.float32)],              # persistent activations
    )
    return pl.pallas_call(
        functools.partial(_resident_kernel, eps=eps),
        out_shape=jax.ShapeDtypeStruct((B, Op), jnp.float32),
        grid_spec=grid_spec,
        compiler_params=pltpu.CompilerParams(
            dimension_semantics=("arbitrary",),
            vmem_limit_bytes=int(vmem_limit),
        ),
    )(*ops)


def _call_streamed(ops, *, B, Ip, Hp, Op, num_layers, eps, wh_buffers, use_buffered,
                   vmem_limit):
    res_buf = 1 if use_buffered else None          # grid-invariant -> single buffer
    wh_buf = wh_buffers if use_buffered else None
    grid_spec = pltpu.PrefetchScalarGridSpec(
        num_scalar_prefetch=0,
        grid=(num_layers,),
        in_specs=[
            _bspec((B, Ip), lambda l: (0, 0), res_buf),                 # x (fetched once)
            _bspec((Ip, Hp), lambda l: (0, 0), res_buf),                # w_in
            _bspec((1, Hp), lambda l: (0, 0), res_buf),                 # b_in
            _bspec((None, Hp, Hp), lambda l: (l, 0, 0), wh_buf),        # w_h: streamed/layer
            _bspec((num_layers, 1, Hp), lambda l: (0, 0, 0), res_buf),  # b_h: resident stack
            _bspec((1, Hp), lambda l: (0, 0), res_buf),                 # gamma
            _bspec((1, Hp), lambda l: (0, 0), res_buf),                 # beta
            _bspec((Hp, Op), lambda l: (0, 0), res_buf),                # w_out
            _bspec((1, Op), lambda l: (0, 0), res_buf),                 # b_out
        ],
        out_specs=pl.BlockSpec((B, Op), lambda l: (0, 0)),              # resident, final write
        scratch_shapes=[pltpu.VMEM((B, Hp), jnp.float32)],              # persistent activations
    )
    return pl.pallas_call(
        functools.partial(_streamed_kernel, eps=eps),
        out_shape=jax.ShapeDtypeStruct((B, Op), jnp.float32),
        grid_spec=grid_spec,
        compiler_params=pltpu.CompilerParams(
            dimension_semantics=("arbitrary",),                         # layer axis is sequential
            vmem_limit_bytes=int(vmem_limit),
        ),
    )(*ops)


# --------------------------------------------------------------------------- wrapper
def residual_mlp(x, params, *, num_layers, eps=1e-5, matmul_dtype=jnp.bfloat16,
                 force_streamed=False):
    assert num_layers >= 1
    B, _ = x.shape
    out_size = params["w_out"].shape[1]
    ops, (Ip, Hp, Op) = _pad_operands(x, params, num_layers, matmul_dtype)

    bpe_w = jnp.dtype(matmul_dtype).itemsize
    cap = _vmem_cap_bytes()
    slack = 4 << 20
    scratch_bytes = B * Hp * 4
    invariant_bytes = (B * Ip * 4 + Ip * Hp * bpe_w + Hp * 4        # x, w_in, b_in
                       + num_layers * Hp * 4                        # resident b_h stack
                       + 2 * Hp * 4                                 # gamma, beta
                       + Hp * Op * bpe_w + Op * 4                   # w_out, b_out
                       + B * Op * 4)                                # output block
    wh_layer_bytes = Hp * Hp * bpe_w

    # --- path 1: everything resident (budget assumes conservative 2x buffering) ------
    resident_need = 2 * (invariant_bytes + num_layers * wh_layer_bytes) + scratch_bytes + slack
    if not force_streamed and resident_need <= cap:
        vmem_limit = min(max(resident_need, 16 << 20), cap)
        out = _call_resident(ops, B=B, Ip=Ip, Hp=Hp, Op=Op, num_layers=num_layers,
                             eps=eps, vmem_limit=vmem_limit)
        return out[:, :out_size].astype(x.dtype)

    # --- path 2: per-layer streamed weights -------------------------------------------
    wh_buffers = 3 if wh_layer_bytes <= (256 << 10) else 2           # deeper pipe for tiny layers
    streamed_min = invariant_bytes + 2 * wh_layer_bytes + scratch_bytes + slack
    if streamed_min > cap:
        raise ValueError(
            f"ResidualMLP streamed kernel needs ~{streamed_min >> 20} MiB VMEM but this TPU "
            f"generation only offers ~{cap >> 20} MiB; hidden size too large for the "
            "unpartitioned layer weight.  # TODO(synk): output-feature (Hp) tiled variant.")
    # Budget also covers the default-buffering fallback (invariants x2).
    streamed_need = 2 * invariant_bytes + wh_buffers * wh_layer_bytes + scratch_bytes + slack
    vmem_limit = min(max(streamed_need, 16 << 20), cap)
    kwargs = dict(B=B, Ip=Ip, Hp=Hp, Op=Op, num_layers=num_layers, eps=eps,
                  wh_buffers=wh_buffers, vmem_limit=vmem_limit)
    try:
        out = _call_streamed(ops, use_buffered=True, **kwargs)
    except Exception:
        # pl.Buffered pipeline hints rejected by this JAX/Mosaic build -> default buffering.
        out = _call_streamed(ops, use_buffered=False, **kwargs)
    return out[:, :out_size].astype(x.dtype)


# --------------------------------------------------------------------------- reference & init
def init_params(key, input_size, hidden_size, output_size, num_layers):
    """Deterministic PyTorch-style init (Linear: U(-1/sqrt(fan_in), 1/sqrt(fan_in)))."""
    ks = jax.random.split(key, 3)

    def linear(k, fan_in, fan_out):
        kw, kb = jax.random.split(k)
        bound = 1.0 / jnp.sqrt(fan_in)
        w = jax.random.uniform(kw, (fan_in, fan_out), jnp.float32, -bound, bound)
        b = jax.random.uniform(kb, (1, fan_out), jnp.float32, -bound, bound)
        return w, b

    w_in, b_in = linear(ks[0], input_size, hidden_size)
    w_out, b_out = linear(ks[1], hidden_size, output_size)
    hk = jax.random.split(ks[2], num_layers)
    pairs = [linear(hk[l], hidden_size, hidden_size) for l in range(num_layers)]
    w_h = jnp.stack([p[0] for p in pairs])
    b_h = jnp.stack([p[1] for p in pairs])
    gamma = jnp.ones((1, hidden_size), jnp.float32)      # shared BatchNorm1d affine init
    beta = jnp.zeros((1, hidden_size), jnp.float32)
    return dict(w_in=w_in, b_in=b_in, w_h=w_h, b_h=b_h,
                gamma=gamma, beta=beta, w_out=w_out, b_out=b_out)


def residual_mlp_ref(x, p, *, num_layers, eps=1e-5):
    """Pure-JAX f32 reference mirroring the PyTorch forward (bn=True, res_connet=True)."""
    residual = x @ p["w_in"] + p["b_in"]
    out = jnp.maximum(residual, 0.0)
    for l in range(num_layers):
        residual = out
        out = out @ p["w_h"][l] + p["b_h"][l]
        out = jnp.maximum(out + residual, 0.0)
        mean = out.mean(0, keepdims=True)
        var = ((out - mean) ** 2).mean(0, keepdims=True)
        out = (out - mean) / jnp.sqrt(var + eps) * p["gamma"] + p["beta"]
    return out @ p["w_out"] + p["b_out"]


# --------------------------------------------------------------------------- demo
if __name__ == "__main__":
    B, INPUT, HIDDEN, OUTPUT, NUM_LAYERS = 8, 16, 32, 8, 2

    key = jax.random.PRNGKey(0)
    kx, kp = jax.random.split(key)
    x = jax.random.normal(kx, (B, INPUT), jnp.float32)
    params = init_params(kp, INPUT, HIDDEN, OUTPUT, NUM_LAYERS)

    ref = residual_mlp_ref(x, params, num_layers=NUM_LAYERS)

    # All-resident fast path (selected automatically at this model size), f32 matmuls.
    out_res_f32 = residual_mlp(x, params, num_layers=NUM_LAYERS, matmul_dtype=jnp.float32)
    # Same path with bf16 MXU operands (perf configuration).
    out_res_bf16 = residual_mlp(x, params, num_layers=NUM_LAYERS)
    # Streamed per-layer-weight path (forced) to validate the large-model code path.
    out_str_f32 = residual_mlp(x, params, num_layers=NUM_LAYERS,
                               matmul_dtype=jnp.float32, force_streamed=True)
    out_res_f32, out_res_bf16, out_str_f32 = jax.block_until_ready(
        (out_res_f32, out_res_bf16, out_str_f32))

    assert out_res_f32.shape == (B, OUTPUT)
    assert out_str_f32.shape == (B, OUTPUT)
    # f32 paths must match the faithful reference tightly (validates padding + centered BN).
    assert jnp.allclose(out_res_f32, ref, atol=1e-4, rtol=1e-4)
    assert jnp.allclose(out_str_f32, ref, atol=1e-4, rtol=1e-4)
    # bf16 perf path: same semantics at reduced matmul precision.
    assert jnp.allclose(out_res_bf16, ref, atol=1e-1, rtol=1e-1)

    print("KERNEL_OK")
</pallas_src>

<mosaic_0001>
module attributes {stable_mosaic.version = 11 : i64} {
  func.func @_resident_kernel(%arg0: i32, %arg1: memref<8x128xf32, #tpu.memory_space<vmem>>, %arg2: memref<128x128xf32, #tpu.memory_space<vmem>>, %arg3: memref<1x128xf32, #tpu.memory_space<vmem>>, %arg4: memref<2x128x128xf32, #tpu.memory_space<vmem>>, %arg5: memref<2x1x128xf32, #tpu.memory_space<vmem>>, %arg6: memref<1x128xf32, #tpu.memory_space<vmem>>, %arg7: memref<1x128xf32, #tpu.memory_space<vmem>>, %arg8: memref<128x128xf32, #tpu.memory_space<vmem>>, %arg9: memref<1x128xf32, #tpu.memory_space<vmem>>, %arg10: memref<8x128xf32, #tpu.memory_space<vmem>>, %arg11: memref<8x128xf32, #tpu.memory_space<vmem>>) attributes {dimension_semantics = [#tpu.dimension_semantics<arbitrary>], iteration_bounds = array<i64: 1>, scalar_prefetch = 0 : i64, scratch_operands = 1 : i64, tpu.core_type = #tpu.core_type<tc>, window_params = [{pipeline_mode = #tpu.pipeline_mode<synchronous>, transform_indices = @transform_0, window_bounds = array<i64: 8, 128>}, {pipeline_mode = #tpu.pipeline_mode<synchronous>, transform_indices = @transform_1, window_bounds = array<i64: 128, 128>}, {pipeline_mode = #tpu.pipeline_mode<synchronous>, transform_indices = @transform_2, window_bounds = array<i64: 1, 128>}, {pipeline_mode = #tpu.pipeline_mode<synchronous>, transform_indices = @transform_3, window_bounds = array<i64: 2, 128, 128>}, {pipeline_mode = #tpu.pipeline_mode<synchronous>, transform_indices = @transform_4, window_bounds = array<i64: 2, 1, 128>}, {pipeline_mode = #tpu.pipeline_mode<synchronous>, transform_indices = @transform_5, window_bounds = array<i64: 1, 128>}, {pipeline_mode = #tpu.pipeline_mode<synchronous>, transform_indices = @transform_6, window_bounds = array<i64: 1, 128>}, {pipeline_mode = #tpu.pipeline_mode<synchronous>, transform_indices = @transform_7, window_bounds = array<i64: 128, 128>}, {pipeline_mode = #tpu.pipeline_mode<synchronous>, transform_indices = @transform_8, window_bounds = array<i64: 1, 128>}, {pipeline_mode = #tpu.pipeline_mode<synchronous>, transform_indices = @transform_9, window_bounds = array<i64: 8, 128>}]} {
    %c0 = arith.constant 0 : index
    %c0_0 = arith.constant 0 : index
    %0 = vector.load %arg1[%c0, %c0_0] : memref<8x128xf32, #tpu.memory_space<vmem>>, vector<8x128xf32>
    %c0_1 = arith.constant 0 : index
    %c0_2 = arith.constant 0 : index
    %1 = vector.load %arg2[%c0_1, %c0_2] : memref<128x128xf32, #tpu.memory_space<vmem>>, vector<128x128xf32>
    %cst = arith.constant dense<0.000000e+00> : vector<8x128xf32>
    %2 = tpu.matmul %0, %1, %cst {dimension_numbers = #tpu.dot_dimension_numbers<[1], [0], [0], [1], [0, 0, 1, 1], [], []>} : vector<8x128xf32>, vector<128x128xf32>, vector<8x128xf32> -> vector<8x128xf32>
    %c0_3 = arith.constant 0 : index
    %c0_4 = arith.constant 0 : index
    %3 = vector.load %arg3[%c0_3, %c0_4] : memref<1x128xf32, #tpu.memory_space<vmem>>, vector<1x128xf32>
    %4 = vector.broadcast %3 : vector<1x128xf32> to vector<8x128xf32>
    %5 = arith.addf %2, %4 : vector<8x128xf32>
    %cst_5 = arith.constant 0.000000e+00 : f32
    %6 = vector.broadcast %cst_5 : f32 to vector<8x128xf32>
    %7 = arith.maximumf %5, %6 : vector<8x128xf32>
    %c0_6 = arith.constant 0 : index
    %c0_7 = arith.constant 0 : index
    %8 = vector.load %arg11[%c0_6, %c0_7] : memref<8x128xf32, #tpu.memory_space<vmem>>, vector<8x128xf32>
    tpu.vector_store %arg11[%c0_6, %c0_7], %7 {strides = array<i32>} : memref<8x128xf32, #tpu.memory_space<vmem>>, vector<8x128xf32>,
    %c0_8 = arith.constant 0 : index
    %c0_9 = arith.constant 0 : index
    %9 = vector.load %arg6[%c0_8, %c0_9] : memref<1x128xf32, #tpu.memory_space<vmem>>, vector<1x128xf32>
    %c0_10 = arith.constant 0 : index
    %c0_11 = arith.constant 0 : index
    %10 = vector.load %arg7[%c0_10, %c0_11] : memref<1x128xf32, #tpu.memory_space<vmem>>, vector<1x128xf32>
    %c0_i32 = arith.constant 0 : i32
    %c2_i32 = arith.constant 2 : i32
    %11 = arith.addi %c0_i32, %c2_i32 : i32
    %c1_i32 = arith.constant 1 : i32
    scf.for %arg12 = %c0_i32 to %11 step %c1_i32  : i32 {
      %c0_22 = arith.constant 0 : index
      %c0_23 = arith.constant 0 : index
      %19 = vector.load %arg11[%c0_22, %c0_23] : memref<8x128xf32, #tpu.memory_space<vmem>>, vector<8x128xf32>
      %20 = arith.index_cast %arg12 : i32 to index
      %c0_24 = arith.constant 0 : index
      %c0_25 = arith.constant 0 : index
      %21 = vector.load %arg4[%20, %c0_24, %c0_25] : memref<2x128x128xf32, #tpu.memory_space<vmem>>, vector<1x128x128xf32>
      %22 = vector.shape_cast %21 : vector<1x128x128xf32> to vector<128x128xf32>
      %23 = arith.index_cast %arg12 : i32 to index
      %c0_26 = arith.constant 0 : index
      %c0_27 = arith.constant 0 : index
      %24 = vector.load %arg5[%23, %c0_26, %c0_27] : memref<2x1x128xf32, #tpu.memory_space<vmem>>, vector<1x1x128xf32>
      %25 = vector.shape_cast %24 : vector<1x1x128xf32> to vector<1x128xf32>
      %cst_28 = arith.constant dense<0.000000e+00> : vector<8x128xf32>
      %26 = tpu.matmul %19, %22, %cst_28 {dimension_numbers = #tpu.dot_dimension_numbers<[1], [0], [0], [1], [0, 0, 1, 1], [], []>} : vector<8x128xf32>, vector<128x128xf32>, vector<8x128xf32> -> vector<8x128xf32>
      %27 = vector.broadcast %25 : vector<1x128xf32> to vector<8x128xf32>
      %28 = arith.addf %26, %27 : vector<8x128xf32>
      %29 = arith.addf %28, %19 : vector<8x128xf32>
      %cst_29 = arith.constant 0.000000e+00 : f32
      %30 = vector.broadcast %cst_29 : f32 to vector<8x128xf32>
      %31 = arith.maximumf %29, %30 : vector<8x128xf32>
      %cst_30 = arith.constant dense<0.000000e+00> : vector<128xf32>
      %32 = vector.multi_reduction <add>, %31, %cst_30 [0] : vector<8x128xf32> to vector<128xf32>
      %33 = vector.shape_cast %32 : vector<128xf32> to vector<1x128xf32>
      %cst_31 = arith.constant 1.250000e-01 : f32
      %34 = vector.broadcast %cst_31 : f32 to vector<1x128xf32>
      %35 = arith.mulf %33, %34 : vector<1x128xf32>
      %36 = vector.broadcast %35 : vector<1x128xf32> to vector<8x128xf32>
      %37 = arith.subf %31, %36 : vector<8x128xf32>
      %38 = arith.mulf %37, %37 : vector<8x128xf32>
      %cst_32 = arith.constant dense<0.000000e+00> : vector<128xf32>
      %39 = vector.multi_reduction <add>, %38, %cst_32 [0] : vector<8x128xf32> to vector<128xf32>
      %40 = vector.shape_cast %39 : vector<128xf32> to vector<1x128xf32>
      %cst_33 = arith.constant 1.250000e-01 : f32
      %41 = vector.broadcast %cst_33 : f32 to vector<1x128xf32>
      %42 = arith.mulf %40, %41 : vector<1x128xf32>
      %cst_34 = arith.constant 9.99999974E-6 : f32
      %43 = vector.broadcast %cst_34 : f32 to vector<1x128xf32>
      %44 = arith.addf %42, %43 : vector<1x128xf32>
      %45 = math.rsqrt %44 : vector<1x128xf32>
      %46 = arith.mulf %9, %45 : vector<1x128xf32>
      %47 = vector.broadcast %46 : vector<1x128xf32> to vector<8x128xf32>
      %48 = arith.mulf %37, %47 : vector<8x128xf32>
      %49 = vector.broadcast %10 : vector<1x128xf32> to vector<8x128xf32>
      %50 = arith.addf %48, %49 : vector<8x128xf32>
      %c0_35 = arith.constant 0 : index
      %c0_36 = arith.constant 0 : index
      %51 = vector.load %arg11[%c0_35, %c0_36] : memref<8x128xf32, #tpu.memory_space<vmem>>, vector<8x128xf32>
      tpu.vector_store %arg11[%c0_35, %c0_36], %50 {strides = array<i32>} : memref<8x128xf32, #tpu.memory_space<vmem>>, vector<8x128xf32>,
    }
    %c2_i32_12 = arith.constant 2 : i32
    %c0_13 = arith.constant 0 : index
    %c0_14 = arith.constant 0 : index
    %12 = vector.load %arg11[%c0_13, %c0_14] : memref<8x128xf32, #tpu.memory_space<vmem>>, vector<8x128xf32>
    %c0_15 = arith.constant 0 : index
    %c0_16 = arith.constant 0 : index
    %13 = vector.load %arg8[%c0_15, %c0_16] : memref<128x128xf32, #tpu.memory_space<vmem>>, vector<128x128xf32>
    %cst_17 = arith.constant dense<0.000000e+00> : vector<8x128xf32>
    %14 = tpu.matmul %12, %13, %cst_17 {dimension_numbers = #tpu.dot_dimension_numbers<[1], [0], [0], [1], [0, 0, 1, 1], [], []>} : vector<8x128xf32>, vector<128x128xf32>, vector<8x128xf32> -> vector<8x128xf32>
    %c0_18 = arith.constant 0 : index
    %c0_19 = arith.constant 0 : index
    %15 = vector.load %arg9[%c0_18, %c0_19] : memref<1x128xf32, #tpu.memory_space<vmem>>, vector<1x128xf32>
    %16 = vector.broadcast %15 : vector<1x128xf32> to vector<8x128xf32>
    %17 = arith.addf %14, %16 : vector<8x128xf32>
    %c0_20 = arith.constant 0 : index
    %c0_21 = arith.constant 0 : index
    %18 = vector.load %arg10[%c0_20, %c0_21] : memref<8x128xf32, #tpu.memory_space<vmem>>, vector<8x128xf32>
    tpu.vector_store %arg10[%c0_20, %c0_21], %17 {strides = array<i32>} : memref<8x128xf32, #tpu.memory_space<vmem>>, vector<8x128xf32>,
    return
  }
  func.func @transform_0(%arg0: i32) -> (i32, i32) {
    %c0_i32 = arith.constant 0 : i32
    %c0_i32_0 = arith.constant 0 : i32
    %c0_i32_1 = arith.constant 0 : i32
    return %c0_i32, %c0_i32_0 : i32, i32
  }
  func.func @transform_1(%arg0: i32) -> (i32, i32) {
    %c0_i32 = arith.constant 0 : i32
    %c0_i32_0 = arith.constant 0 : i32
    %c0_i32_1 = arith.constant 0 : i32
    return %c0_i32, %c0_i32_0 : i32, i32
  }
  func.func @transform_2(%arg0: i32) -> (i32, i32) {
    %c0_i32 = arith.constant 0 : i32
    %c0_i32_0 = arith.constant 0 : i32
    %c0_i32_1 = arith.constant 0 : i32
    return %c0_i32, %c0_i32_0 : i32, i32
  }
  func.func @transform_3(%arg0: i32) -> (i32, i32, i32) {
    %c0_i32 = arith.constant 0 : i32
    %c0_i32_0 = arith.constant 0 : i32
    %c0_i32_1 = arith.constant 0 : i32
    %c0_i32_2 = arith.constant 0 : i32
    return %c0_i32, %c0_i32_0, %c0_i32_1 : i32, i32, i32
  }
  func.func @transform_4(%arg0: i32) -> (i32, i32, i32) {
    %c0_i32 = arith.constant 0 : i32
    %c0_i32_0 = arith.constant 0 : i32
    %c0_i32_1 = arith.constant 0 : i32
    %c0_i32_2 = arith.constant 0 : i32
    return %c0_i32, %c0_i32_0, %c0_i32_1 : i32, i32, i32
  }
  func.func @transform_5(%arg0: i32) -> (i32, i32) {
    %c0_i32 = arith.constant 0 : i32
    %c0_i32_0 = arith.constant 0 : i32
    %c0_i32_1 = arith.constant 0 : i32
    return %c0_i32, %c0_i32_0 : i32, i32
  }
  func.func @transform_6(%arg0: i32) -> (i32, i32) {
    %c0_i32 = arith.constant 0 : i32
    %c0_i32_0 = arith.constant 0 : i32
    %c0_i32_1 = arith.constant 0 : i32
    return %c0_i32, %c0_i32_0 : i32, i32
  }
  func.func @transform_7(%arg0: i32) -> (i32, i32) {
    %c0_i32 = arith.constant 0 : i32
    %c0_i32_0 = arith.constant 0 : i32
    %c0_i32_1 = arith.constant 0 : i32
    return %c0_i32, %c0_i32_0 : i32, i32
  }
  func.func @transform_8(%arg0: i32) -> (i32, i32) {
    %c0_i32 = arith.constant 0 : i32
    %c0_i32_0 = arith.constant 0 : i32
    %c0_i32_1 = arith.constant 0 : i32
    return %c0_i32, %c0_i32_0 : i32, i32
  }
  func.func @transform_9(%arg0: i32) -> (i32, i32) {
    %c0_i32 = arith.constant 0 : i32
    %c0_i32_0 = arith.constant 0 : i32
    %c0_i32_1 = arith.constant 0 : i32
    return %c0_i32, %c0_i32_0 : i32, i32
  }
}

</mosaic_0001>

<llo_original>
// kernel: tpu_custom_call.1
$region0: #{tpu_custom_call.1}
  #allocation0 [shape = 'u32[]', space=smem, size = 0x4, offset = 0x4, fixed_abs, tag = 'smem constant byte address 0x4 - core index']
  #allocation1 [shape = 'u32[72,128]{1,0:T(1,128)}', space=vmem, size = 0x9000, scoped, tag = 'internal scratch']
  #allocation2 [shape = 'f32[8,128]{1,0:T(8,128)}', space=vmem, size = 0x1000, scoped, tag = 'scratch operand']
  %s0 = inlined_call_operand.hbm [shape: f32[8,128], index: 0, kind: input, shape index: {}]
  %s1 = inlined_call_operand.hbm [shape: f32[128,128], index: 1, kind: input, shape index: {}]
  %s2 = inlined_call_operand.vmem [shape: f32[1,128], index: 2, kind: input, shape index: {}]
  %s3 = inlined_call_operand.hbm [shape: f32[2,128,128], index: 3, kind: input, shape index: {}]
  %s4 = inlined_call_operand.vmem [shape: f32[2,1,128], index: 4, kind: input, shape index: {}]
  %s5 = inlined_call_operand.vmem [shape: f32[1,128], index: 5, kind: input, shape index: {}]
  %s6 = inlined_call_operand.vmem [shape: f32[1,128], index: 6, kind: input, shape index: {}]
  %s7 = inlined_call_operand.hbm [shape: f32[128,128], index: 7, kind: input, shape index: {}]
  %s8 = inlined_call_operand.vmem [shape: f32[1,128], index: 8, kind: input, shape index: {}]
  %s9 = inlined_call_operand.hbm [shape: f32[8,128], index: 9, kind: output, shape index: {}]
  %s10 = sld [smem:[#allocation0]]
  $region69: #{tpu_custom_call.1} parent=0
    _
  %s12 = ssub.s32 1, %s10
  %s13 = scalar_select 0, %s12, %s10
  $region1: #{tpu_custom_call.1} parent=0
    #allocation3 [shape = 'u8[4096]{0}', space=vmem, size = 0x1000, scoped, tag = 'input window, operand 0, single buffered']
    #allocation4 [shape = 's32[1]{0}', space=sflag, size = 0x4, scoped, tag = 'scoped memory for tpu_custom_call.1']
    #allocation5 [shape = 's32[1]{0}', space=sflag, size = 0x4, scoped, tag = 'scoped memory for tpu_custom_call.1']
    #allocation6 [shape = 'u8[65536]{0}', space=vmem, size = 0x10000, scoped, tag = 'input window, operand 1, single buffered']
    #allocation7 [shape = 's32[1]{0}', space=sflag, size = 0x4, scoped, tag = 'scoped memory for tpu_custom_call.1']
    #allocation8 [shape = 'u8[131072]{0}', space=vmem, size = 0x20000, scoped, tag = 'input window, operand 3, single buffered']
    #allocation9 [shape = 'u8[65536]{0}', space=vmem, size = 0x10000, scoped, tag = 'input window, operand 7, single buffered']
    #allocation10 [shape = 's32[1]{0}', space=sflag, size = 0x4, scoped, tag = 'scoped memory for tpu_custom_call.1']
    #allocation11 [shape = 'u8[4096]{0}', space=vmem, size = 0x1000, scoped, tag = 'output window, operand 0, single buffered']
    %14 = vsyncpa [#allocation4], 0
    %15 = vsyncpa [#allocation7], 0
    %16 = vsyncpa [#allocation10], 0
    %17 = vsyncpa [#allocation5], 0
    // Predicated region
    $region2: #{tpu_custom_call.1} parent=1 // pred_check
      _
    $region3: #{tpu_custom_call.1} parent=1 // pred_check_branch
      %19 = sbr.rel (0) target = $region5
    $region4: #{tpu_custom_call.1} parent=1 // pred_region
      %21 = vsyncadd [#allocation4], 0
      %s23 = sshll.u32 %s0, 4
      %s24 = int_to_ptr.hbm [resolvable:$true] %s23
      %s25 = sshll.u32 [#allocation3], 4
      %s26 = int_to_ptr.vmem [resolvable:$true] %s25
      %28 = dma.hbm_to_vmem [thread:$0]  %s24, 128, %s26, [#allocation4]
    $region5: #{tpu_custom_call.1} parent=1 // pred_fallthru
      _
    // Predicated region
    $region6: #{tpu_custom_call.1} parent=1 // pred_check
      _
    $region7: #{tpu_custom_call.1} parent=1 // pred_check_branch
      %30 = sbr.rel (0) target = $region9
    $region8: #{tpu_custom_call.1} parent=1 // pred_region
      %32 = vsyncadd [#allocation7], 0
      %s33 = sshll.u32 %s1, 4
      %s34 = int_to_ptr.hbm [resolvable:$true] %s33
      %s35 = sshll.u32 [#allocation6], 4
      %s36 = int_to_ptr.vmem [resolvable:$true] %s35
      %41 = dma.hbm_to_vmem [thread:$0]  %s34, 2048, %s36, [#allocation7], 128, 128, 8
    $region9: #{tpu_custom_call.1} parent=1 // pred_fallthru
      _
    // Predicated region
    $region10: #{tpu_custom_call.1} parent=1 // pred_check
      _
    $region11: #{tpu_custom_call.1} parent=1 // pred_check_branch
      %43 = sbr.rel (0) target = $region13
    $region12: #{tpu_custom_call.1} parent=1 // pred_region
      _
    $region13: #{tpu_custom_call.1} parent=1 // pred_fallthru
      _
    // Predicated region
    $region14: #{tpu_custom_call.1} parent=1 // pred_check
      _
    $region15: #{tpu_custom_call.1} parent=1 // pred_check_branch
      %45 = sbr.rel (0) target = $region17
    $region16: #{tpu_custom_call.1} parent=1 // pred_region
      %47 = vsyncadd [#allocation7], 0
      %s48 = sshll.u32 %s3, 4
      %s49 = int_to_ptr.hbm [resolvable:$true] %s48
      %s50 = sshll.u32 [#allocation8], 4
      %s51 = int_to_ptr.vmem [resolvable:$true] %s50
      %56 = dma.hbm_to_vmem [thread:$0]  %s49, 4096, %s51, [#allocation7], 128, 128, 8
    $region17: #{tpu_custom_call.1} parent=1 // pred_fallthru
      _
    // Predicated region
    $region18: #{tpu_custom_call.1} parent=1 // pred_check
      _
    $region19: #{tpu_custom_call.1} parent=1 // pred_check_branch
      %58 = sbr.rel (0) target = $region21
    $region20: #{tpu_custom_call.1} parent=1 // pred_region
      _
    $region21: #{tpu_custom_call.1} parent=1 // pred_fallthru
      _
    // Predicated region
    $region22: #{tpu_custom_call.1} parent=1 // pred_check
      _
    $region23: #{tpu_custom_call.1} parent=1 // pred_check_branch
      %60 = sbr.rel (0) target = $region25
    $region24: #{tpu_custom_call.1} parent=1 // pred_region
      _
    $region25: #{tpu_custom_call.1} parent=1 // pred_fallthru
      _
    // Predicated region
    $region26: #{tpu_custom_call.1} parent=1 // pred_check
      _
    $region27: #{tpu_custom_call.1} parent=1 // pred_check_branch
      %62 = sbr.rel (0) target = $region29
    $region28: #{tpu_custom_call.1} parent=1 // pred_region
      _
    $region29: #{tpu_custom_call.1} parent=1 // pred_fallthru
      _
    // Predicated region
    $region30: #{tpu_custom_call.1} parent=1 // pred_check
      _
    $region31: #{tpu_custom_call.1} parent=1 // pred_check_branch
      %64 = sbr.rel (0) target = $region33
    $region32: #{tpu_custom_call.1} parent=1 // pred_region
      %66 = vsyncadd [#allocation10], 0
      %s67 = sshll.u32 %s7, 4
      %s68 = int_to_ptr.hbm [resolvable:$true] %s67
      %s69 = sshll.u32 [#allocation9], 4
      %s70 = int_to_ptr.vmem [resolvable:$true] %s69
      %75 = dma.hbm_to_vmem [thread:$0]  %s68, 2048, %s70, [#allocation10], 128, 128, 8
    $region33: #{tpu_custom_call.1} parent=1 // pred_fallthru
      _
    // Predicated region
    $region34: #{tpu_custom_call.1} parent=1 // pred_check
      _
    $region35: #{tpu_custom_call.1} parent=1 // pred_check_branch
      %77 = sbr.rel (0) target = $region37
    $region36: #{tpu_custom_call.1} parent=1 // pred_region
      _
    $region37: #{tpu_custom_call.1} parent=1 // pred_fallthru
      _
    // Predicated region
    $region38: #{tpu_custom_call.1} parent=1 // pred_check
      _
    $region39: #{tpu_custom_call.1} parent=1 // pred_check_branch
      %79 = sbr.rel (0) target = $region41
    $region40: #{tpu_custom_call.1} parent=1 // pred_region
      %81 = dma.done [#allocation4], 128
    $region41: #{tpu_custom_call.1} parent=1 // pred_fallthru
      _
    // Predicated region
    $region42: #{tpu_custom_call.1} parent=1 // pred_check
      _
    $region43: #{tpu_custom_call.1} parent=1 // pred_check_branch
      %83 = sbr.rel (0) target = $region45
    $region44: #{tpu_custom_call.1} parent=1 // pred_region
      %85 = dma.done [#allocation7], 2048
    $region45: #{tpu_custom_call.1} parent=1 // pred_fallthru
      _
    // Predicated region
    $region46: #{tpu_custom_call.1} parent=1 // pred_check
      _
    $region47: #{tpu_custom_call.1} parent=1 // pred_check_branch
      %87 = sbr.rel (0) target = $region49
    $region48: #{tpu_custom_call.1} parent=1 // pred_region
      %89 = dma.done [#allocation7], 4096
    $region49: #{tpu_custom_call.1} parent=1 // pred_fallthru
      _
    // Predicated region
    $region50: #{tpu_custom_call.1} parent=1 // pred_check
      _
    $region51: #{tpu_custom_call.1} parent=1 // pred_check_branch
      %91 = sbr.rel (0) target = $region53
    $region52: #{tpu_custom_call.1} parent=1 // pred_region
      %93 = dma.done [#allocation10], 2048
    $region53: #{tpu_custom_call.1} parent=1 // pred_fallthru
      _
    %v94 = vld [vmem:[#allocation3] sm:$0xff]
    %v95 = vld [vmem:[#allocation6] sm:$0xff]
    %v96 = vld [vmem:[#allocation6 + $0x8] sm:$0xff]
    %v97 = vld [vmem:[#allocation6 + $0x10] sm:$0xff]
    %v98 = vld [vmem:[#allocation6 + $0x18] sm:$0xff]
    %v99 = vld [vmem:[#allocation6 + $0x20] sm:$0xff]
    %v100 = vld [vmem:[#allocation6 + $0x28] sm:$0xff]
    %v101 = vld [vmem:[#allocation6 + $0x30] sm:$0xff]
    %v102 = vld [vmem:[#allocation6 + $0x38] sm:$0xff]
    %v103 = vld [vmem:[#allocation6 + $0x40] sm:$0xff]
    %v104 = vld [vmem:[#allocation6 + $0x48] sm:$0xff]
    %v105 = vld [vmem:[#allocation6 + $0x50] sm:$0xff]
    %v106 = vld [vmem:[#allocation6 + $0x58] sm:$0xff]
    %v107 = vld [vmem:[#allocation6 + $0x60] sm:$0xff]
    %v108 = vld [vmem:[#allocation6 + $0x68] sm:$0xff]
    %v109 = vld [vmem:[#allocation6 + $0x70] sm:$0xff]
    %v110 = vld [vmem:[#allocation6 + $0x78] sm:$0xff]
    %v111 = vld [vmem:[%s2] sm:$0x1]
    %v113 = vperm.slane %v111, 0
    %115 = vmatpush.msra.mxu0 %v110
    %116 = vmatpush.msra.mxu0 %v109
    %117 = vmatpush.msra.mxu0 %v108
    %118 = vmatpush.msra.mxu0 %v107
    %119 = vmatpush.msra.mxu0 %v106
    %120 = vmatpush.msra.mxu0 %v105
    %121 = vmatpush.msra.mxu0 %v104
    %122 = vmatpush.msra.mxu0 %v103
    %123 = vmatpush.msra.mxu0 %v102
    %124 = vmatpush.msra.mxu0 %v101
    %125 = vmatpush.msra.mxu0 %v100
    %126 = vmatpush.msra.mxu0 %v99
    %127 = vmatpush.msra.mxu0 %v98
    %128 = vmatpush.msra.mxu0 %v97
    %129 = vmatpush.msra.mxu0 %v96
    %130 = vmatpush.msra.mxu0 %v95
    %131 = vmatmul.f32.gmra.mxu0 %v94
    %v132 = vpop.f32.mrf.mxu0
    %v133 = vadd.f32 %v113, %v132
    %134 = vdwg.mxu0
    %v135 = vmax.f32 %v133, 0.0
    %136 = vst [vmem:[#allocation2] sm:$0xff] %v135
    %v137 = vld [vmem:[%s5] sm:$0x1]
    %v138 = vld [vmem:[%s6] sm:$0x1]
    loop: start=0, step=1, limit=2
    $region54: #{tpu_custom_call.1} parent=1 // loop_pre_header
      _
    $region55: #{tpu_custom_call.1} parent=1 // loop_header
      %s140 = sphi 0, %s144
      %p141 = scmp.ge.s32.totalorder %s140, 2
    $region56: #{tpu_custom_call.1} parent=1 // loop_header_branch
      %143 = sbr.rel (%p141) target = $region60
    $region57: #{tpu_custom_call.1} parent=1 // loop_body
      %v145 = vld [vmem:[#allocation2] sm:$0xff]
      %s146 = smul.u32 %s140, 128
      %s147 = scalar_lea.vmem [#allocation8], %s146
      %v148 = vld [vmem:[%s147] sm:$0xff]
      %v149 = vld [vmem:[%s147 + $0x8] sm:$0xff]
      %v150 = vld [vmem:[%s147 + $0x10] sm:$0xff]
      %v151 = vld [vmem:[%s147 + $0x18] sm:$0xff]
      %v152 = vld [vmem:[%s147 + $0x20] sm:$0xff]
      %v153 = vld [vmem:[%s147 + $0x28] sm:$0xff]
      %v154 = vld [vmem:[%s147 + $0x30] sm:$0xff]
      %v155 = vld [vmem:[%s147 + $0x38] sm:$0xff]
      %v156 = vld [vmem:[%s147 + $0x40] sm:$0xff]
      %v157 = vld [vmem:[%s147 + $0x48] sm:$0xff]
      %v158 = vld [vmem:[%s147 + $0x50] sm:$0xff]
      %v159 = vld [vmem:[%s147 + $0x58] sm:$0xff]
      %v160 = vld [vmem:[%s147 + $0x60] sm:$0xff]
      %v161 = vld [vmem:[%s147 + $0x68] sm:$0xff]
      %v162 = vld [vmem:[%s147 + $0x70] sm:$0xff]
      %v163 = vld [vmem:[%s147 + $0x78] sm:$0xff]
      %s164 = scalar_lea.vmem %s4, %s140
      %v165 = vld [vmem:[%s164] sm:$0x1]
      %v167 = vperm.slane %v165, 0
      %169 = vmatpush.msra.mxu0 %v163
      %170 = vmatpush.msra.mxu0 %v162
      %171 = vmatpush.msra.mxu0 %v161
      %172 = vmatpush.msra.mxu0 %v160
      %173 = vmatpush.msra.mxu0 %v159
      %174 = vmatpush.msra.mxu0 %v158
      %175 = vmatpush.msra.mxu0 %v157
      %176 = vmatpush.msra.mxu0 %v156
      %177 = vmatpush.msra.mxu0 %v155
      %178 = vmatpush.msra.mxu0 %v154
      %179 = vmatpush.msra.mxu0 %v153
      %180 = vmatpush.msra.mxu0 %v152
      %181 = vmatpush.msra.mxu0 %v151
      %182 = vmatpush.msra.mxu0 %v150
      %183 = vmatpush.msra.mxu0 %v149
      %184 = vmatpush.msra.mxu0 %v148
      %185 = vmatmul.f32.gmra.mxu0 %v145
      %v186 = vpop.f32.mrf.mxu0
      %v187 = vadd.f32 %v167, %v186
      %188 = vdwg.mxu0
      %v189 = vadd.f32 %v187, %v145
      %v190 = vmax.f32 %v189, 0.0
      %v191 = vrot.slane %v190, 4
      %v192 = vadd.f32 %v190, %v191
      %v193 = vrot.slane %v192, 2
      %v194 = vadd.f32 %v192, %v193
      %v195 = vrot.slane %v194, 1
      %v196 = vadd.f32 %v194, %v195
      %v197 = vmul.f32 %v196, 0.125
      %v198 = vsub.f32 %v190, %v197
      %v199 = vmul.f32 %v198, %v198
      %v200 = vrot.slane %v199, 4
      %v201 = vadd.f32 %v199, %v200
      %v202 = vrot.slane %v201, 2
      %v203 = vadd.f32 %v201, %v202
      %v204 = vrot.slane %v203, 1
      %v205 = vadd.f32 %v203, %v204
      %v206 = vmul.f32 %v205, 0.125
      %v207 = vadd.f32 %v206, 1e-05
      %v208 = vrsqrt.pop %v207
      %v209 = vmul.f32 %v208, %v207
      %v210 = vmul.f32 %v209, %v208
      %v211 = vmul.f32 0.5, %v210
      %v212 = vsub.f32 1.5, %v211
      %v213 = vmul.f32 %v208, %v212
      %vm214 = vweird.f32 %v207
      %vm215 = vweird.f32 %v208
      %vm216 = vmor %vm214, %vm215
      %v217 = vsel %vm216, %v208, %v213
      %v218 = vmul.f32 %v137, %v217
      %v220 = vperm.slane %v218, 0
      %v222 = vmul.f32 %v198, %v220
      %v224 = vperm.slane %v138, 0
      %v226 = vadd.f32 %v222, %v224
      %227 = vst [vmem:[#allocation2] sm:$0xff] %v226
    $region58: #{tpu_custom_call.1} parent=1 // loop_footer
      %s144 = sadd.s32 1, %s140
    $region59: #{tpu_custom_call.1} parent=1 // loop_footer_branch
      %139 = sbr.rel target = $region55
    $region60: #{tpu_custom_call.1} parent=1 // loop_exit
      _
    %v228 = vld [vmem:[#allocation2] sm:$0xff]
    %v229 = vld [vmem:[#allocation9] sm:$0xff]
    %v230 = vld [vmem:[#allocation9 + $0x8] sm:$0xff]
    %v231 = vld [vmem:[#allocation9 + $0x10] sm:$0xff]
    %v232 = vld [vmem:[#allocation9 + $0x18] sm:$0xff]
    %v233 = vld [vmem:[#allocation9 + $0x20] sm:$0xff]
    %v234 = vld [vmem:[#allocation9 + $0x28] sm:$0xff]
    %v235 = vld [vmem:[#allocation9 + $0x30] sm:$0xff]
    %v236 = vld [vmem:[#allocation9 + $0x38] sm:$0xff]
    %v237 = vld [vmem:[#allocation9 + $0x40] sm:$0xff]
    %v238 = vld [vmem:[#allocation9 + $0x48] sm:$0xff]
    %v239 = vld [vmem:[#allocation9 + $0x50] sm:$0xff]
    %v240 = vld [vmem:[#allocation9 + $0x58] sm:$0xff]
    %v241 = vld [vmem:[#allocation9 + $0x60] sm:$0xff]
    %v242 = vld [vmem:[#allocation9 + $0x68] sm:$0xff]
    %v243 = vld [vmem:[#allocation9 + $0x70] sm:$0xff]
    %v244 = vld [vmem:[#allocation9 + $0x78] sm:$0xff]
    %v245 = vld [vmem:[%s8] sm:$0x1]
    %v247 = vperm.slane %v245, 0
    %249 = vmatpush.msra.mxu0 %v244
    %250 = vmatpush.msra.mxu0 %v243
    %251 = vmatpush.msra.mxu0 %v242
    %252 = vmatpush.msra.mxu0 %v241
    %253 = vmatpush.msra.mxu0 %v240
    %254 = vmatpush.msra.mxu0 %v239
    %255 = vmatpush.msra.mxu0 %v238
    %256 = vmatpush.msra.mxu0 %v237
    %257 = vmatpush.msra.mxu0 %v236
    %258 = vmatpush.msra.mxu0 %v235
    %259 = vmatpush.msra.mxu0 %v234
    %260 = vmatpush.msra.mxu0 %v233
    %261 = vmatpush.msra.mxu0 %v232
    %262 = vmatpush.msra.mxu0 %v231
    %263 = vmatpush.msra.mxu0 %v230
    %264 = vmatpush.msra.mxu0 %v229
    %265 = vmatmul.f32.gmra.mxu0 %v228
    %v266 = vpop.f32.mrf.mxu0
    %v267 = vadd.f32 %v247, %v266
    %268 = vdwg.mxu0
    %269 = vst [vmem:[#allocation11] sm:$0xff] %v267
    // Predicated region
    $region61: #{tpu_custom_call.1} parent=1 // pred_check
      _
    $region62: #{tpu_custom_call.1} parent=1 // pred_check_branch
      %271 = sbr.rel (0) target = $region64
    $region63: #{tpu_custom_call.1} parent=1 // pred_region
      %273 = vsyncadd [#allocation5], 0
      %s275 = sshll.u32 [#allocation11], 4
      %s276 = int_to_ptr.vmem [resolvable:$true] %s275
      %s277 = sshll.u32 %s9, 4
      %s278 = int_to_ptr.hbm [resolvable:$true] %s277
      %280 = dma.vmem_to_hbm [thread:$0]  %s276, 128, %s278, [#allocation5]
    $region64: #{tpu_custom_call.1} parent=1 // pred_fallthru
      _
    // Predicated region
    $region65: #{tpu_custom_call.1} parent=1 // pred_check
      _
    $region66: #{tpu_custom_call.1} parent=1 // pred_check_branch
      %282 = sbr.rel (0) target = $region68
    $region67: #{tpu_custom_call.1} parent=1 // pred_region
      %284 = dma.done [#allocation5], 128
    $region68: #{tpu_custom_call.1} parent=1 // pred_fallthru
      _
    %285 = vsyncpa [#allocation4], 1
    %286 = vsyncpa [#allocation7], 1
    %287 = vsyncpa [#allocation10], 1
    %288 = vsyncpa [#allocation5], 1

</llo_original>
